<compile_context>
chip_gen: v6e
topology: v6e:2x2x1
jax: 0.10.0
libtpu: 0.0.40
codegen_flags: <defaults>
</compile_context>

<pallas_src>
import functools
import math

import jax
import jax.numpy as jnp
from jax.experimental import pallas as pl
from jax.experimental.pallas import tpu as pltpu


def channel_gate_kernel(x_ref, w1_ref, b1_ref, w2_ref, b2_ref, o_ref, acc_ref,
                        *, inv_hw, lane_chunks):
    """Grid = (N tiles, HW tiles). Axis 1 is the spatial reduction.

    x_ref:  (TN, C, THW)   w1_ref: (C, Cr)   b1_ref: (1, Cr)
    w2_ref: (Cr, C)        b2_ref: (1, C)    o_ref:  (TN, C)
    acc_ref: (TN, C, 128) f32 lane-wise partial-sum accumulator.
    """
    k = pl.program_id(1)

    @pl.when(k == 0)
    def _init():
        acc_ref[...] = jnp.zeros_like(acc_ref)

    if lane_chunks == 1:
        acc_ref[...] += x_ref[...].astype(jnp.float32)
    else:
        # Stream 128-lane chunks from the VMEM tile into the accumulator.
        # Each iteration is load + add + store, so vreg liveness stays O(1).
        def chunk_body(j, carry):
            start = pl.multiple_of(j * 128, 128)
            acc_ref[...] += x_ref[:, :, pl.ds(start, 128)].astype(jnp.float32)
            return carry

        jax.lax.fori_loop(0, lane_chunks, chunk_body, 0,
                          unroll=(lane_chunks <= 8))

    @pl.when(k == pl.num_programs(1) - 1)
    def _finalize():
        # Single cross-lane reduce + mean (zeros in the padded tail are inert).
        pooled = jnp.sum(acc_ref[...], axis=-1) * inv_hw          # (TN, C)

        # conv1 (1x1) == linear: (TN, C) @ (C, Cr) + b1, ReLU.
        h = jnp.dot(pooled, w1_ref[...], preferred_element_type=jnp.float32)
        h = jnp.maximum(h + b1_ref[...], 0.0)                     # (TN, Cr)

        # conv2 (1x1) == linear: (TN, Cr) @ (Cr, C) + b2, sigmoid.
        y = jnp.dot(h, w2_ref[...], preferred_element_type=jnp.float32)
        y = jax.nn.sigmoid(y + b2_ref[...])                       # (TN, C)

        o_ref[...] = y.astype(o_ref.dtype)


def _round_up(a, b):
    return ((a + b - 1) // b) * b


def _choose_spatial_tile(HW, TN, C, itemsize, max_block_bytes):
    """Pick a 128-aligned spatial tile near the byte budget."""
    chunks = _round_up(HW, 128) // 128
    budget = max(1, max_block_bytes // (TN * C * itemsize * 128))
    n = min(chunks, budget)
    # Prefer a chunk count that divides the 128-aligned extent (no padding
    # beyond the 128 alignment), as long as it is within 2x of the budget.
    best = 1
    for d in range(n, 0, -1):
        if chunks % d == 0:
            best = d
            break
    if 2 * best >= n:
        n = best
    return n * 128


def channel_gate(x_nchw, w1, b1, w2, b2, *, hw_tile=None, max_block_bytes=None):
    """x_nchw: (N, C, H, W); w1: (C, Cr); b1: (Cr,); w2: (Cr, C); b2: (C,).

    Returns (N, C, 1, 1) — matches the PyTorch module output shape.
    """
    N, C, H, W = x_nchw.shape
    Cr = w1.shape[1]
    HW = H * W
    itemsize = jnp.dtype(x_nchw.dtype).itemsize

    # Device-aware budgets (v7x: 64 MiB physical VMEM; v5e/v6e: 128 MiB).
    try:
        vmem_cap = int(pltpu.get_tpu_info().vmem_capacity_bytes)
    except Exception:
        vmem_cap = 64 * 1024 * 1024  # conservative (v7x-sized) fallback
    if max_block_bytes is None:
        max_block_bytes = (16 * 1024 * 1024 if vmem_cap >= 100 * 1024 * 1024
                           else 8 * 1024 * 1024)

    # --- N tiling: >=2 parallel blocks when possible (v7x megacore) ---------
    if N > 8:
        N_pad = _round_up(N, 8)
        TN = 8
    else:
        N_pad = N
        TN = N

    # --- HW tiling: lane-dense, 128-aligned, near the byte budget -----------
    if hw_tile is not None:
        assert hw_tile % 128 == 0, "hw_tile must be a multiple of 128"
        THW = hw_tile
    else:
        THW = _choose_spatial_tile(HW, TN, C, itemsize, max_block_bytes)
    HW_pad = _round_up(HW, THW)
    lane_chunks = THW // 128

    x_flat = x_nchw.reshape(N, C, HW)
    if HW_pad != HW or N_pad != N:
        # Zero padding is inert for the sum; the mean divides by the true HW.
        x_flat = jnp.pad(x_flat, ((0, N_pad - N), (0, 0), (0, HW_pad - HW)))

    b1_2d = b1.reshape(1, Cr)
    b2_2d = b2.reshape(1, C)

    # VMEM accounting: double-buffered x tile + resident weights/biases +
    # accumulator + output, plus headroom; capped against physical VMEM.
    x_block_bytes = TN * C * THW * itemsize
    w_bytes = (C * Cr + Cr + Cr * C + C) * 4
    acc_bytes = math.prod((TN, C, 128)) * 4
    out_bytes = TN * C * itemsize
    need = 2 * x_block_bytes + 2 * w_bytes + acc_bytes + 2 * out_bytes + (2 << 20)
    vmem_limit = max(need + (1 << 20), 32 * 1024 * 1024)
    vmem_limit = int(min(vmem_limit, int(0.9 * vmem_cap)))

    kernel = functools.partial(channel_gate_kernel,
                               inv_hw=1.0 / float(HW),
                               lane_chunks=lane_chunks)

    out = pl.pallas_call(
        kernel,
        out_shape=jax.ShapeDtypeStruct((N_pad, C), x_nchw.dtype),
        grid_spec=pltpu.PrefetchScalarGridSpec(
            num_scalar_prefetch=0,
            grid=(N_pad // TN, HW_pad // THW),     # reduction axis trailing
            in_specs=[
                pl.BlockSpec((TN, C, THW), lambda i, k: (i, 0, k)),
                pl.BlockSpec((C, Cr), lambda i, k: (0, 0)),   # resident
                pl.BlockSpec((1, Cr), lambda i, k: (0, 0)),   # resident
                pl.BlockSpec((Cr, C), lambda i, k: (0, 0)),   # resident
                pl.BlockSpec((1, C), lambda i, k: (0, 0)),    # resident
            ],
            out_specs=pl.BlockSpec((TN, C), lambda i, k: (i, 0)),
            scratch_shapes=[pltpu.VMEM((TN, C, 128), jnp.float32)],
        ),
        compiler_params=pltpu.CompilerParams(
            dimension_semantics=("parallel", "arbitrary"),
            vmem_limit_bytes=vmem_limit),
    )(x_flat, w1, b1_2d, w2, b2_2d)

    return out[:N].reshape(N, C, 1, 1)


def init_params(key, out_channels):
    """Deterministic parameter init mimicking PyTorch Conv2d defaults.
    Weights are returned already transposed for right-multiplication:
    w1 (C, Cr), w2 (Cr, C)."""
    C = out_channels
    Cr = out_channels // 16
    k1, k2, k3, k4 = jax.random.split(key, 4)
    bound1 = 1.0 / math.sqrt(C)    # conv1 fan_in = C * 1 * 1
    bound2 = 1.0 / math.sqrt(Cr)   # conv2 fan_in = Cr * 1 * 1
    w1 = jax.random.uniform(k1, (C, Cr), jnp.float32, -bound1, bound1)
    b1 = jax.random.uniform(k2, (Cr,), jnp.float32, -bound1, bound1)
    w2 = jax.random.uniform(k3, (Cr, C), jnp.float32, -bound2, bound2)
    b2 = jax.random.uniform(k4, (C,), jnp.float32, -bound2, bound2)
    return w1, b1, w2, b2


def channel_gate_ref(x_nchw, w1, b1, w2, b2):
    hi = jax.lax.Precision.HIGHEST
    pooled = jnp.mean(x_nchw, axis=(2, 3))                               # (N, C)
    h = jnp.maximum(jnp.dot(pooled, w1, precision=hi) + b1[None, :], 0.0)
    y = jax.nn.sigmoid(jnp.dot(h, w2, precision=hi) + b2[None, :])       # (N, C)
    return y[:, :, None, None]


if __name__ == "__main__":
    key = jax.random.PRNGKey(0)
    kx1, kx2, kp = jax.random.split(key, 3)

    # Case 1: canonical small shape (HW multiple of 128), forced 2-step reduction.
    N, C, H, W = 2, 32, 16, 16   # C >= 16 so C // 16 >= 1; HW = 256
    x = jax.random.normal(kx1, (N, C, H, W), jnp.float32)
    w1, b1, w2, b2 = init_params(kp, C)
    ref = channel_gate_ref(x, w1, b1, w2, b2)

    # Tolerance is set for MXU f32-matmul precision differences vs XLA.
    out = jax.block_until_ready(channel_gate(x, w1, b1, w2, b2, hw_tile=128))
    assert out.shape == (N, C, 1, 1)
    assert jnp.allclose(out, ref, atol=1e-3, rtol=1e-3)

    # Case 2: auto-tiled path (single spatial step, multi-chunk accumulation).
    out2 = jax.block_until_ready(channel_gate(x, w1, b1, w2, b2))
    assert jnp.allclose(out2, ref, atol=1e-3, rtol=1e-3)

    # Case 3: non-multiple-of-128 spatial extent (9x9=81) and N > 8, exercising
    # the zero-padding path and the TN=8 "parallel" tiling.
    N3, H3, W3 = 10, 9, 9
    x3 = jax.random.normal(kx2, (N3, C, H3, W3), jnp.float32)
    ref3 = channel_gate_ref(x3, w1, b1, w2, b2)
    out3 = jax.block_until_ready(channel_gate(x3, w1, b1, w2, b2))
    assert out3.shape == (N3, C, 1, 1)
    assert jnp.allclose(out3, ref3, atol=1e-3, rtol=1e-3)

    print("KERNEL_OK")
</pallas_src>

<mosaic_0001>
module attributes {stable_mosaic.version = 11 : i64} {
  func.func @channel_gate_kernel(%arg0: i32, %arg1: i32, %arg2: memref<2x32x128xf32, #tpu.memory_space<vmem>>, %arg3: memref<32x2xf32, #tpu.memory_space<vmem>>, %arg4: memref<1x2xf32, #tpu.memory_space<vmem>>, %arg5: memref<2x32xf32, #tpu.memory_space<vmem>>, %arg6: memref<1x32xf32, #tpu.memory_space<vmem>>, %arg7: memref<2x32xf32, #tpu.memory_space<vmem>>, %arg8: memref<2x32x128xf32, #tpu.memory_space<vmem>>) attributes {dimension_semantics = [#tpu.dimension_semantics<parallel>, #tpu.dimension_semantics<arbitrary>], iteration_bounds = array<i64: 1, 2>, scalar_prefetch = 0 : i64, scratch_operands = 1 : i64, tpu.core_type = #tpu.core_type<tc>, window_params = [{transform_indices = @transform_0, window_bounds = array<i64: 2, 32, 128>}, {pipeline_mode = #tpu.pipeline_mode<synchronous>, transform_indices = @transform_1, window_bounds = array<i64: 32, 2>}, {pipeline_mode = #tpu.pipeline_mode<synchronous>, transform_indices = @transform_2, window_bounds = array<i64: 1, 2>}, {pipeline_mode = #tpu.pipeline_mode<synchronous>, transform_indices = @transform_3, window_bounds = array<i64: 2, 32>}, {pipeline_mode = #tpu.pipeline_mode<synchronous>, transform_indices = @transform_4, window_bounds = array<i64: 1, 32>}, {transform_indices = @transform_5, window_bounds = array<i64: 2, 32>}]} {
    %c0_i32 = arith.constant 0 : i32
    %0 = arith.cmpi eq, %arg1, %c0_i32 : i32
    %1 = arith.extui %0 : i1 to i32
    %c0_i32_0 = arith.constant 0 : i32
    %2 = arith.cmpi ne, %1, %c0_i32_0 : i32
    scf.if %2 {
      %cst = arith.constant 0.000000e+00 : f32
      %10 = vector.broadcast %cst : f32 to vector<2x32x128xf32>
      %c0_10 = arith.constant 0 : index
      %c0_11 = arith.constant 0 : index
      %c0_12 = arith.constant 0 : index
      %11 = vector.load %arg8[%c0_10, %c0_11, %c0_12] : memref<2x32x128xf32, #tpu.memory_space<vmem>>, vector<2x32x128xf32>
      tpu.vector_store %arg8[%c0_10, %c0_11, %c0_12], %10 {strides = array<i32>} : memref<2x32x128xf32, #tpu.memory_space<vmem>>, vector<2x32x128xf32>,
    } else {
    }
    %c0 = arith.constant 0 : index
    %c0_1 = arith.constant 0 : index
    %c0_2 = arith.constant 0 : index
    %3 = vector.load %arg8[%c0, %c0_1, %c0_2] : memref<2x32x128xf32, #tpu.memory_space<vmem>>, vector<2x32x128xf32>
    %c0_3 = arith.constant 0 : index
    %c0_4 = arith.constant 0 : index
    %c0_5 = arith.constant 0 : index
    %4 = vector.load %arg2[%c0_3, %c0_4, %c0_5] : memref<2x32x128xf32, #tpu.memory_space<vmem>>, vector<2x32x128xf32>
    %5 = arith.addf %3, %4 : vector<2x32x128xf32>
    %c0_6 = arith.constant 0 : index
    %c0_7 = arith.constant 0 : index
    %c0_8 = arith.constant 0 : index
    %6 = vector.load %arg8[%c0_6, %c0_7, %c0_8] : memref<2x32x128xf32, #tpu.memory_space<vmem>>, vector<2x32x128xf32>
    tpu.vector_store %arg8[%c0_6, %c0_7, %c0_8], %5 {strides = array<i32>} : memref<2x32x128xf32, #tpu.memory_space<vmem>>, vector<2x32x128xf32>,
    %c1_i32 = arith.constant 1 : i32
    %7 = arith.cmpi eq, %arg1, %c1_i32 : i32
    %8 = arith.extui %7 : i1 to i32
    %c0_i32_9 = arith.constant 0 : i32
    %9 = arith.cmpi ne, %8, %c0_i32_9 : i32
    scf.if %9 {
      %c0_10 = arith.constant 0 : index
      %c0_11 = arith.constant 0 : index
      %c0_12 = arith.constant 0 : index
      %10 = vector.load %arg8[%c0_10, %c0_11, %c0_12] : memref<2x32x128xf32, #tpu.memory_space<vmem>>, vector<2x32x128xf32>
      %cst = arith.constant dense<0.000000e+00> : vector<2x32xf32>
      %11 = vector.multi_reduction <add>, %10, %cst [2] : vector<2x32x128xf32> to vector<2x32xf32>
      %cst_13 = arith.constant 3.906250e-03 : f32
      %12 = vector.broadcast %cst_13 : f32 to vector<2x32xf32>
      %13 = arith.mulf %11, %12 : vector<2x32xf32>
      %c0_14 = arith.constant 0 : index
      %c0_15 = arith.constant 0 : index
      %14 = vector.load %arg3[%c0_14, %c0_15] : memref<32x2xf32, #tpu.memory_space<vmem>>, vector<32x2xf32>
      %cst_16 = arith.constant dense<0.000000e+00> : vector<2x2xf32>
      %15 = tpu.matmul %13, %14, %cst_16 {dimension_numbers = #tpu.dot_dimension_numbers<[1], [0], [0], [1], [0, 0, 1, 1], [], []>} : vector<2x32xf32>, vector<32x2xf32>, vector<2x2xf32> -> vector<2x2xf32>
      %c0_17 = arith.constant 0 : index
      %c0_18 = arith.constant 0 : index
      %16 = vector.load %arg4[%c0_17, %c0_18] : memref<1x2xf32, #tpu.memory_space<vmem>>, vector<1x2xf32>
      %17 = vector.broadcast %16 : vector<1x2xf32> to vector<2x2xf32>
      %18 = arith.addf %15, %17 : vector<2x2xf32>
      %cst_19 = arith.constant 0.000000e+00 : f32
      %19 = vector.broadcast %cst_19 : f32 to vector<2x2xf32>
      %20 = arith.maximumf %18, %19 : vector<2x2xf32>
      %c0_20 = arith.constant 0 : index
      %c0_21 = arith.constant 0 : index
      %21 = vector.load %arg5[%c0_20, %c0_21] : memref<2x32xf32, #tpu.memory_space<vmem>>, vector<2x32xf32>
      %cst_22 = arith.constant dense<0.000000e+00> : vector<2x32xf32>
      %22 = tpu.matmul %20, %21, %cst_22 {dimension_numbers = #tpu.dot_dimension_numbers<[1], [0], [0], [1], [0, 0, 1, 1], [], []>} : vector<2x2xf32>, vector<2x32xf32>, vector<2x32xf32> -> vector<2x32xf32>
      %c0_23 = arith.constant 0 : index
      %c0_24 = arith.constant 0 : index
      %23 = vector.load %arg6[%c0_23, %c0_24] : memref<1x32xf32, #tpu.memory_space<vmem>>, vector<1x32xf32>
      %24 = vector.broadcast %23 : vector<1x32xf32> to vector<2x32xf32>
      %25 = arith.addf %22, %24 : vector<2x32xf32>
      %26 = arith.negf %25 : vector<2x32xf32>
      %27 = math.exp %26 : vector<2x32xf32>
      %cst_25 = arith.constant 1.000000e+00 : f32
      %28 = vector.broadcast %cst_25 : f32 to vector<2x32xf32>
      %29 = arith.addf %28, %27 : vector<2x32xf32>
      %30 = arith.divf %28, %29 : vector<2x32xf32>
      %c0_26 = arith.constant 0 : index
      %c0_27 = arith.constant 0 : index
      %31 = vector.load %arg7[%c0_26, %c0_27] : memref<2x32xf32, #tpu.memory_space<vmem>>, vector<2x32xf32>
      tpu.vector_store %arg7[%c0_26, %c0_27], %30 {strides = array<i32>} : memref<2x32xf32, #tpu.memory_space<vmem>>, vector<2x32xf32>,
    } else {
    }
    return
  }
  func.func @transform_0(%arg0: i32, %arg1: i32) -> (i32, i32, i32) {
    %c0_i32 = arith.constant 0 : i32
    %c0_i32_0 = arith.constant 0 : i32
    return %arg0, %c0_i32, %arg1 : i32, i32, i32
  }
  func.func @transform_1(%arg0: i32, %arg1: i32) -> (i32, i32) {
    %c0_i32 = arith.constant 0 : i32
    %c0_i32_0 = arith.constant 0 : i32
    %c0_i32_1 = arith.constant 0 : i32
    return %c0_i32, %c0_i32_0 : i32, i32
  }
  func.func @transform_2(%arg0: i32, %arg1: i32) -> (i32, i32) {
    %c0_i32 = arith.constant 0 : i32
    %c0_i32_0 = arith.constant 0 : i32
    %c0_i32_1 = arith.constant 0 : i32
    return %c0_i32, %c0_i32_0 : i32, i32
  }
  func.func @transform_3(%arg0: i32, %arg1: i32) -> (i32, i32) {
    %c0_i32 = arith.constant 0 : i32
    %c0_i32_0 = arith.constant 0 : i32
    %c0_i32_1 = arith.constant 0 : i32
    return %c0_i32, %c0_i32_0 : i32, i32
  }
  func.func @transform_4(%arg0: i32, %arg1: i32) -> (i32, i32) {
    %c0_i32 = arith.constant 0 : i32
    %c0_i32_0 = arith.constant 0 : i32
    %c0_i32_1 = arith.constant 0 : i32
    return %c0_i32, %c0_i32_0 : i32, i32
  }
  func.func @transform_5(%arg0: i32, %arg1: i32) -> (i32, i32) {
    %c0_i32 = arith.constant 0 : i32
    %c0_i32_0 = arith.constant 0 : i32
    return %arg0, %c0_i32 : i32, i32
  }
}

</mosaic_0001>

<llo_original>
// kernel: tpu_custom_call.1
$region0: #{tpu_custom_call.1}
  #allocation0 [shape = 'u32[]', space=smem, size = 0x4, offset = 0x4, fixed_abs, tag = 'smem constant byte address 0x4 - core index']
  #allocation1 [shape = 'u32[144,128]{1,0:T(1,128)}', space=vmem, size = 0x12000, scoped, tag = 'internal scratch']
  #allocation2 [shape = 'f32[2,32,128]{2,1,0:T(8,128)}', space=vmem, size = 0x8000, scoped, tag = 'scratch operand']
  %s0 = inlined_call_operand.hbm [shape: f32[2,32,256], index: 0, kind: input, shape index: {}]
  %s1 = inlined_call_operand.vmem [shape: f32[32,2], index: 1, kind: input, shape index: {}]
  %s2 = inlined_call_operand.vmem [shape: f32[1,2], index: 2, kind: input, shape index: {}]
  %s3 = inlined_call_operand.vmem [shape: f32[2,32], index: 3, kind: input, shape index: {}]
  %s4 = inlined_call_operand.vmem [shape: f32[1,32], index: 4, kind: input, shape index: {}]
  %s5 = inlined_call_operand.hbm [shape: f32[2,32], index: 5, kind: output, shape index: {}]
  %s6 = sld [smem:[#allocation0]]
  $region65: #{tpu_custom_call.1} parent=0
    _
  %s8 = ssub.s32 1, %s6
  %s9 = scalar_select 0, %s8, %s6
  $region1: #{tpu_custom_call.1} parent=0
    #allocation3 [shape = 'u8[65536]{0}', space=vmem, size = 0x10000, scoped, tag = 'input window, operand 0']
    #allocation4 [shape = 's32[2]{0}', space=sflag, size = 0x8, scoped, tag = 'scoped memory for tpu_custom_call.1']
    #allocation5 [shape = 's32[2]{0}', space=sflag, size = 0x8, scoped, tag = 'scoped memory for tpu_custom_call.1']
    #allocation6 [shape = 'u8[1024]{0}', space=vmem, size = 0x400, scoped, tag = 'output window, operand 0, single buffered']
    %10 = vsyncpa [#allocation4], 0
    %s11 = scalar_lea.sflag [#allocation4], 1
    %12 = vsyncpa %s11, 0
    %13 = vsyncpa [#allocation5], 0
    loop: start=0, step=1, limit=4
    $region2: #{tpu_custom_call.1} parent=1 // loop_pre_header
      _
    $region3: #{tpu_custom_call.1} parent=1 // loop_header
      %s15 = sphi 0, %s19
      %p16 = scmp.ge.s32.totalorder %s15, 4
      %s22 = sphi 0, %s34
      %s23 = sphi 0, %s30
      %s24 = sphi 0, %s22
      %s25 = sphi 0, %s23
      %s26 = sphi 0, %s24
      %s27 = sphi 0, %s25
      %s39 = sphi 0, %s41
      %s42 = sphi 0, %s39
      %s43 = sphi 0, %s42
      %s59 = sphi 0, %s43
      %s63 = sphi 0, %s63
      %s65 = sphi 0, %s63
      %s66 = sphi 0, %s65
      %s80 = sphi 0, %s66
      %s84 = sphi 0, %s84
      %s86 = sphi 0, %s84
      %s87 = sphi 0, %s86
      %s101 = sphi 0, %s87
      %s105 = sphi 0, %s105
      %s107 = sphi 0, %s105
      %s108 = sphi 0, %s107
      %s122 = sphi 0, %s108
      %s126 = sphi 0, %s126
      %s128 = sphi 0, %s126
      %s129 = sphi 0, %s128
      %s143 = sphi 0, %s129
      %s149 = sphi 0, %s151
      %s152 = sphi 0, %s149
      %s153 = sphi 0, %s152
      %s169 = sphi 0, %s153
    $region4: #{tpu_custom_call.1} parent=1 // loop_header_branch
      %18 = sbr.rel (%p16) target = $region8
    $region5: #{tpu_custom_call.1} parent=1 // loop_body
      %s20 = ssub.s32 %s15, 1
      %s21 = ssub.s32 %s15, 2
      %s28 = sadd.s32 1, %s23
      %p29 = scmp.ge.s32.totalorder %s28, 2
      %s30 = scalar_select %p29, 0, %s28
      %s31 = sadd.s32 1, %s22
      %s32 = scalar_select %p29, %s31, %s22
      %p33 = scmp.ge.s32.totalorder %s32, 1
      %s34 = scalar_select %p33, 0, %s32
      %s35 = ssub.s32 %s22, %s34
      %s36 = ssub.s32 %s23, %s30
      %s37 = sor.u32 %s35, %s36
      %p38 = scmp.eq.s32.totalorder %s37, 0
      %s40 = sadd.s32 %s39, 1
      %s41 = scalar_select %p38, %s39, %s40
      %p44 = pneg %p38
      %p45 = scmp.eq.s32.totalorder %s15, 1
      %p46 = por %p44, %p45
      %p47 = scmp.ne.s32.totalorder %s39, %s42
      %p48 = scmp.eq.s32.totalorder %s15, 0
      %p49 = por %p47, %p48
      %p50 = scmp.ne.s32.totalorder %s39, %s42
      %p51 = scmp.eq.s32.totalorder %s20, 1
      %p52 = por %p50, %p51
      %p53 = scmp.ne.s32.totalorder %s42, %s43
      %p54 = scmp.eq.s32.totalorder %s20, 0
      %p55 = por %p53, %p54
      %p56 = scmp.ne.s32.totalorder %s42, %s43
      %p57 = scmp.eq.s32.totalorder %s21, 1
      %p58 = por %p56, %p57
      %p60 = scmp.ne.s32.totalorder %s43, %s59
      %p61 = scmp.eq.s32.totalorder %s21, 0
      %p62 = por %p60, %p61
      %s64 = sadd.s32 %s63, 1
      %p67 = scmp.eq.s32.totalorder %s15, 1
      %p68 = scmp.ne.s32.totalorder %s63, %s65
      %p69 = scmp.eq.s32.totalorder %s15, 0
      %p70 = por %p68, %p69
      %p71 = scmp.ne.s32.totalorder %s63, %s65
      %p72 = scmp.eq.s32.totalorder %s20, 1
      %p73 = por %p71, %p72
      %p74 = scmp.ne.s32.totalorder %s65, %s66
      %p75 = scmp.eq.s32.totalorder %s20, 0
      %p76 = por %p74, %p75
      %p77 = scmp.ne.s32.totalorder %s65, %s66
      %p78 = scmp.eq.s32.totalorder %s21, 1
      %p79 = por %p77, %p78
      %p81 = scmp.ne.s32.totalorder %s66, %s80
      %p82 = scmp.eq.s32.totalorder %s21, 0
      %p83 = por %p81, %p82
      %s85 = sadd.s32 %s84, 1
      %p88 = scmp.eq.s32.totalorder %s15, 1
      %p89 = scmp.ne.s32.totalorder %s84, %s86
      %p90 = scmp.eq.s32.totalorder %s15, 0
      %p91 = por %p89, %p90
      %p92 = scmp.ne.s32.totalorder %s84, %s86
      %p93 = scmp.eq.s32.totalorder %s20, 1
      %p94 = por %p92, %p93
      %p95 = scmp.ne.s32.totalorder %s86, %s87
      %p96 = scmp.eq.s32.totalorder %s20, 0
      %p97 = por %p95, %p96
      %p98 = scmp.ne.s32.totalorder %s86, %s87
      %p99 = scmp.eq.s32.totalorder %s21, 1
      %p100 = por %p98, %p99
      %p102 = scmp.ne.s32.totalorder %s87, %s101
      %p103 = scmp.eq.s32.totalorder %s21, 0
      %p104 = por %p102, %p103
      %s106 = sadd.s32 %s105, 1
      %p109 = scmp.eq.s32.totalorder %s15, 1
      %p110 = scmp.ne.s32.totalorder %s105, %s107
      %p111 = scmp.eq.s32.totalorder %s15, 0
      %p112 = por %p110, %p111
      %p113 = scmp.ne.s32.totalorder %s105, %s107
      %p114 = scmp.eq.s32.totalorder %s20, 1
      %p115 = por %p113, %p114
      %p116 = scmp.ne.s32.totalorder %s107, %s108
      %p117 = scmp.eq.s32.totalorder %s20, 0
      %p118 = por %p116, %p117
      %p119 = scmp.ne.s32.totalorder %s107, %s108
      %p120 = scmp.eq.s32.totalorder %s21, 1
      %p121 = por %p119, %p120
      %p123 = scmp.ne.s32.totalorder %s108, %s122
      %p124 = scmp.eq.s32.totalorder %s21, 0
      %p125 = por %p123, %p124
      %s127 = sadd.s32 %s126, 1
      %p130 = scmp.eq.s32.totalorder %s15, 1
      %p131 = scmp.ne.s32.totalorder %s126, %s128
      %p132 = scmp.eq.s32.totalorder %s15, 0
      %p133 = por %p131, %p132
      %p134 = scmp.ne.s32.totalorder %s126, %s128
      %p135 = scmp.eq.s32.totalorder %s20, 1
      %p136 = por %p134, %p135
      %p137 = scmp.ne.s32.totalorder %s128, %s129
      %p138 = scmp.eq.s32.totalorder %s20, 0
      %p139 = por %p137, %p138
      %p140 = scmp.ne.s32.totalorder %s128, %s129
      %p141 = scmp.eq.s32.totalorder %s21, 1
      %p142 = por %p140, %p141
      %p144 = scmp.ne.s32.totalorder %s129, %s143
      %p145 = scmp.eq.s32.totalorder %s21, 0
      %p146 = por %p144, %p145
      %s147 = ssub.s32 %s22, %s34
      %p148 = scmp.eq.s32.totalorder %s147, 0
      %s150 = sadd.s32 %s149, 1
      %s151 = scalar_select %p148, %s149, %s150
      %p154 = pneg %p148
      %p155 = scmp.eq.s32.totalorder %s15, 1
      %p156 = por %p154, %p155
      %p157 = scmp.ne.s32.totalorder %s149, %s152
      %p158 = scmp.eq.s32.totalorder %s15, 0
      %p159 = por %p157, %p158
      %p160 = scmp.ne.s32.totalorder %s149, %s152
      %p161 = scmp.eq.s32.totalorder %s20, 1
      %p162 = por %p160, %p161
      %p163 = scmp.ne.s32.totalorder %s152, %s153
      %p164 = scmp.eq.s32.totalorder %s20, 0
      %p165 = por %p163, %p164
      %p166 = scmp.ne.s32.totalorder %s152, %s153
      %p167 = scmp.eq.s32.totalorder %s21, 1
      %p168 = por %p166, %p167
      %p170 = scmp.ne.s32.totalorder %s153, %s169
      %p171 = scmp.eq.s32.totalorder %s21, 0
      %p172 = por %p170, %p171
      %p173 = scmp.le.s32.totalorder 1, %s15
      %p174 = scmp.lt.s32.totalorder %s15, 3
      %p175 = pnand %p173, %p174
      %p176 = pneg %p175
      // Predicated region
      $region9: #{tpu_custom_call.1} parent=5 // pred_check
        _
      $region10: #{tpu_custom_call.1} parent=5 // pred_check_branch
        %178 = sbr.rel (%p175) target = $region12
      $region11: #{tpu_custom_call.1} parent=5 // pred_region
        %s179 = ssub.s32 %s15, 1
        // Predicated region
        $region13: #{tpu_custom_call.1} parent=11 // pred_check
          %p180 = pneg %p76
        $region14: #{tpu_custom_call.1} parent=11 // pred_check_branch
          %182 = sbr.rel (%p180) target = $region16
        $region15: #{tpu_custom_call.1} parent=11 // pred_region
          _
        $region16: #{tpu_custom_call.1} parent=11 // pred_fallthru
          _
        // Predicated region
        $region17: #{tpu_custom_call.1} parent=11 // pred_check
          %p183 = pneg %p97
        $region18: #{tpu_custom_call.1} parent=11 // pred_check_branch
          %185 = sbr.rel (%p183) target = $region20
        $region19: #{tpu_custom_call.1} parent=11 // pred_region
          _
        $region20: #{tpu_custom_call.1} parent=11 // pred_fallthru
          _
        // Predicated region
        $region21: #{tpu_custom_call.1} parent=11 // pred_check
          %p186 = pneg %p118
        $region22: #{tpu_custom_call.1} parent=11 // pred_check_branch
          %188 = sbr.rel (%p186) target = $region24
        $region23: #{tpu_custom_call.1} parent=11 // pred_region
          _
        $region24: #{tpu_custom_call.1} parent=11 // pred_fallthru
          _
        // Predicated region
        $region25: #{tpu_custom_call.1} parent=11 // pred_check
          %p189 = pneg %p139
        $region26: #{tpu_custom_call.1} parent=11 // pred_check_branch
          %191 = sbr.rel (%p189) target = $region28
        $region27: #{tpu_custom_call.1} parent=11 // pred_region
          _
        $region28: #{tpu_custom_call.1} parent=11 // pred_fallthru
          _
      $region12: #{tpu_custom_call.1} parent=5 // pred_fallthru
        _
      %p192 = scmp.lt.s32.totalorder %s15, 2
      // Predicated region
      $region29: #{tpu_custom_call.1} parent=5 // pred_check
        %p193 = pneg %p192
      $region30: #{tpu_custom_call.1} parent=5 // pred_check_branch
        %195 = sbr.rel (%p193) target = $region32
      $region31: #{tpu_custom_call.1} parent=5 // pred_region
        // Predicated region
        $region33: #{tpu_custom_call.1} parent=31 // pred_check
          %p196 = pneg %p49
        $region34: #{tpu_custom_call.1} parent=31 // pred_check_branch
          %198 = sbr.rel (%p196) target = $region36
        $region35: #{tpu_custom_call.1} parent=31 // pred_region
          %s199 = sand.u32 %s39, 1
          %s200 = scalar_lea.sflag [#allocation4], %s199
          %s201 = sand.u32 %s39, 1
          %s202 = smul.addr %s201, 64
          %s203 = scalar_lea.vmem [#allocation3], %s202
          %s204 = smul.u32 2, %s22
          %s206 = ssub.s32 1024, 1024
          %207 = vsyncadd %s200, %s206
          %s208 = smul.addr %s204, 8
          %s209 = sadd.s32 %s23, %s208
          %s210 = smul.addr %s209, 128
          %s211 = scalar_lea.hbm %s0, %s210
          %s212 = sshll.u32 %s203, 4
          %s213 = int_to_ptr.vmem [resolvable:$true] %s212
          %218 = dma.hbm_to_vmem [thread:$0]  %s211, 1024, %s213, %s200, 256, 128, 8
        $region36: #{tpu_custom_call.1} parent=31 // pred_fallthru
          _
      $region32: #{tpu_custom_call.1} parent=5 // pred_fallthru
        _
      %p219 = scmp.le.s32.totalorder 1, %s15
      %p220 = scmp.lt.s32.totalorder %s15, 3
      %p221 = pnand %p219, %p220
      %p222 = pneg %p221
      // Predicated region
      $region37: #{tpu_custom_call.1} parent=5 // pred_check
        _
      $region38: #{tpu_custom_call.1} parent=5 // pred_check_branch
        %224 = sbr.rel (%p221) target = $region40
      $region39: #{tpu_custom_call.1} parent=5 // pred_region
        %s225 = ssub.s32 %s15, 1
        %s226 = sand.u32 %s42, 1
        %s227 = scalar_lea.sflag [#allocation4], %s226
        %s228 = sand.u32 %s42, 1
        %s229 = smul.addr %s228, 64
        %s230 = scalar_lea.vmem [#allocation3], %s229
        // Predicated region
        $region41: #{tpu_custom_call.1} parent=39 // pred_check
          %p231 = pneg %p55
        $region42: #{tpu_custom_call.1} parent=39 // pred_check_branch
          %233 = sbr.rel (%p231) target = $region44
        $region43: #{tpu_custom_call.1} parent=39 // pred_region
          %234 = dma.done %s227, 1024
        $region44: #{tpu_custom_call.1} parent=39 // pred_fallthru
          _
        %s235 = sand.u32 %s42, 1
        %s236 = scalar_lea.sflag [#allocation4], %s235
        %s237 = sand.u32 %s42, 1
        %s238 = smul.addr %s237, 64
        %s239 = scalar_lea.vmem [#allocation3], %s238
        %p240 = pneg %p55
        %p241 = pneg %p52
        %p242 = pneg %p76
        %p243 = pneg %p73
        %p244 = pneg %p97
        %p245 = pneg %p94
        %p246 = pneg %p118
        %p247 = pneg %p115
        %p248 = pneg %p139
        %p249 = pneg %p136
        %p250 = pneg %p165
        %p251 = pneg %p162
        %s252 = smul.u32 2, %s24
        %p253 = scmp.eq.s32.totalorder %s25, 0
        // Predicated region
        $region45: #{tpu_custom_call.1} parent=39 // pred_check
          %p254 = pneg %p253
        $region46: #{tpu_custom_call.1} parent=39 // pred_check_branch
          %256 = sbr.rel (%p254) target = $region48
        $region47: #{tpu_custom_call.1} parent=39 // pred_region
          %257 = vst [vmem:[#allocation2] sm:$0xff] 0.0
          %258 = vst [vmem:[#allocation2 + $0x8] sm:$0xff] 0.0
          %259 = vst [vmem:[#allocation2 + $0x10] sm:$0xff] 0.0
          %260 = vst [vmem:[#allocation2 + $0x18] sm:$0xff] 0.0
          %261 = vst [vmem:[#allocation2 + $0x20] sm:$0xff] 0.0
          %262 = vst [vmem:[#allocation2 + $0x28] sm:$0xff] 0.0
          %263 = vst [vmem:[#allocation2 + $0x30] sm:$0xff] 0.0
          %264 = vst [vmem:[#allocation2 + $0x38] sm:$0xff] 0.0
        $region48: #{tpu_custom_call.1} parent=39 // pred_fallthru
          _
        %v265 = vld [vmem:[#allocation2] sm:$0xff]
        %v266 = vld [vmem:[#allocation2 + $0x8] sm:$0xff]
        %v267 = vld [vmem:[#allocation2 + $0x10] sm:$0xff]
        %v268 = vld [vmem:[#allocation2 + $0x18] sm:$0xff]
        %v269 = vld [vmem:[#allocation2 + $0x20] sm:$0xff]
        %v270 = vld [vmem:[#allocation2 + $0x28] sm:$0xff]
        %v271 = vld [vmem:[#allocation2 + $0x30] sm:$0xff]
        %v272 = vld [vmem:[#allocation2 + $0x38] sm:$0xff]
        %v273 = vld [vmem:[%s230] sm:$0xff]
        %v274 = vld [vmem:[%s230 + $0x8] sm:$0xff]
        %v275 = vld [vmem:[%s230 + $0x10] sm:$0xff]
        %v276 = vld [vmem:[%s230 + $0x18] sm:$0xff]
        %v277 = vld [vmem:[%s230 + $0x20] sm:$0xff]
        %v278 = vld [vmem:[%s230 + $0x28] sm:$0xff]
        %v279 = vld [vmem:[%s230 + $0x30] sm:$0xff]
        %v280 = vld [vmem:[%s230 + $0x38] sm:$0xff]
        %v281 = vadd.f32 %v265, %v273
        %v282 = vadd.f32 %v266, %v274
        %v283 = vadd.f32 %v267, %v275
        %v284 = vadd.f32 %v268, %v276
        %v285 = vadd.f32 %v269, %v277
        %v286 = vadd.f32 %v270, %v278
        %v287 = vadd.f32 %v271, %v279
        %v288 = vadd.f32 %v272, %v280
        %289 = vst [vmem:[#allocation2] sm:$0xff] %v281
        %290 = vst [vmem:[#allocation2 + $0x8] sm:$0xff] %v282
        %291 = vst [vmem:[#allocation2 + $0x10] sm:$0xff] %v283
        %292 = vst [vmem:[#allocation2 + $0x18] sm:$0xff] %v284
        %293 = vst [vmem:[#allocation2 + $0x20] sm:$0xff] %v285
        %294 = vst [vmem:[#allocation2 + $0x28] sm:$0xff] %v286
        %295 = vst [vmem:[#allocation2 + $0x30] sm:$0xff] %v287
        %296 = vst [vmem:[#allocation2 + $0x38] sm:$0xff] %v288
        %p297 = scmp.eq.s32.totalorder %s25, 1
        // Predicated region
        $region49: #{tpu_custom_call.1} parent=39 // pred_check
          %p298 = pneg %p297
        $region50: #{tpu_custom_call.1} parent=39 // pred_check_branch
          %300 = sbr.rel (%p298) target = $region52
        $region51: #{tpu_custom_call.1} parent=39 // pred_region
          %v301 = vld [vmem:[#allocation2] sm:$0xff]
          %v302 = vld [vmem:[#allocation2 + $0x8] sm:$0xff]
          %v303 = vld [vmem:[#allocation2 + $0x10] sm:$0xff]
          %v304 = vld [vmem:[#allocation2 + $0x18] sm:$0xff]
          %v305 = vld [vmem:[#allocation2 + $0x20] sm:$0xff]
          %v306 = vld [vmem:[#allocation2 + $0x28] sm:$0xff]
          %v307 = vld [vmem:[#allocation2 + $0x30] sm:$0xff]
          %v308 = vld [vmem:[#allocation2 + $0x38] sm:$0xff]
          %309 = vadd.xlane.f32.xlu0 %v301
          %v310 = vpop.xlane.xlu0 %309
          %311 = vadd.xlane.f32.xlu0 %v302
          %v312 = vpop.xlane.xlu0 %311
          %313 = vadd.xlane.f32.xlu0 %v303
          %v314 = vpop.xlane.xlu0 %313
          %315 = vadd.xlane.f32.xlu0 %v304
          %v316 = vpop.xlane.xlu0 %315
          %317 = vadd.xlane.f32.xlu0 %v305
          %v318 = vpop.xlane.xlu0 %317
          %319 = vadd.xlane.f32.xlu0 %v306
          %v320 = vpop.xlane.xlu0 %319
          %321 = vadd.xlane.f32.xlu0 %v307
          %v322 = vpop.xlane.xlu0 %321
          %323 = vadd.xlane.f32.xlu0 %v308
          %v324 = vpop.xlane.xlu0 %323
          %v325 = vmul.f32 %v310, 0.00390625
          %v326 = vmul.f32 %v312, 0.00390625
          %v327 = vmul.f32 %v314, 0.00390625
          %v328 = vmul.f32 %v316, 0.00390625
          %v329 = vmul.f32 %v318, 0.00390625
          %v330 = vmul.f32 %v320, 0.00390625
          %v331 = vmul.f32 %v322, 0.00390625
          %v332 = vmul.f32 %v324, 0.00390625
          %v333 = vld [vmem:[%s1] sm:$0xff]
          %v334 = vld [vmem:[%s1 + $0x8] sm:$0xff]
          %v335 = vld [vmem:[%s1 + $0x10] sm:$0xff]
          %v336 = vld [vmem:[%s1 + $0x18] sm:$0xff]
          %v337 = vld [vmem:[%s2] sm:$0x1]
          %v339 = vlaneseq
          %v340 = vshrl.u32 %v339, 7
          %v341 = vsub.s32 0, %v340
          %v342 = vrot.slane %v337, %v341
          %v352 = vlaneseq
          %v353 = vand.u32 %v352, 127
          %v354 = vlaneseq
          %v355 = vshrl.u32 %v354, 7
          %v356 = vsub.s32 %v353, %v355
          %v357 = vrot.slane %v325, %v356
          %v358 = vadd.s32 %v353, 4294967288
          %v359 = vlaneseq
          %v360 = vshrl.u32 %v359, 7
          %v361 = vsub.s32 %v358, %v360
          %v362 = vrot.slane %v326, %v361
          %vm363 = vcmask 130112
          %v364 = vsel %vm363, %v362, %v357
          %v365 = vadd.s32 %v353, 4294967280
          %v366 = vlaneseq
          %v367 = vshrl.u32 %v366, 7
          %v368 = vsub.s32 %v365, %v367
          %v369 = vrot.slane %v327, %v368
          %vm370 = vcmask 195712
          %v371 = vsel %vm370, %v369, %v364
          %v372 = vadd.s32 %v353, 4294967272
          %v373 = vlaneseq
          %v374 = vshrl.u32 %v373, 7
          %v375 = vsub.s32 %v372, %v374
          %v376 = vrot.slane %v328, %v375
          %vm377 = vcmask 261312
          %v378 = vsel %vm377, %v376, %v371
          %v379 = vlaneseq
          %v380 = vshrl.u32 %v379, 7
          %v381 = vsub.s32 %v353, %v380
          %v382 = vrot.slane %v329, %v381
          %v383 = vlaneseq
          %v384 = vshrl.u32 %v383, 7
          %v385 = vsub.s32 %v358, %v384
          %v386 = vrot.slane %v330, %v385
          %v387 = vsel %vm363, %v386, %v382
          %v388 = vlaneseq
          %v389 = vshrl.u32 %v388, 7
          %v390 = vsub.s32 %v365, %v389
          %v391 = vrot.slane %v331, %v390
          %v392 = vsel %vm370, %v391, %v387
          %v393 = vlaneseq
          %v394 = vshrl.u32 %v393, 7
          %v395 = vsub.s32 %v372, %v394
          %v396 = vrot.slane %v332, %v395
          %v397 = vsel %vm377, %v396, %v392
          %vm398 = vcmask 1041409
          %v399 = vsel %vm398, %v397, %v378
          %vm400 = vcmask 261120
          %v401 = vsel %vm400, %v399, 0
          %403 = vmatprep.subr.mxu0 0.0
          %404 = vmatpush1.msra.mxu0 0.0
          %405 = vmatprep.subr.mxu0 0.0
          %406 = vmatpush1.msra.mxu0 0.0
          %407 = vmatprep.subr.mxu0 0.0
          %408 = vmatpush1.msra.mxu0 0.0
          %409 = vmatprep.subr.mxu0 0.0
          %410 = vmatpush1.msra.mxu0 0.0
          %411 = vmatprep.subr.mxu0 0.0
          %412 = vmatpush1.msra.mxu0 0.0
          %413 = vmatprep.subr.mxu0 0.0
          %414 = vmatpush1.msra.mxu0 0.0
          %415 = vmatprep.subr.mxu0 0.0
          %416 = vmatpush1.msra.mxu0 0.0
          %417 = vmatprep.subr.mxu0 0.0
          %418 = vmatpush1.msra.mxu0 0.0
          %419 = vmatprep.subr.mxu0 0.0
          %420 = vmatpush1.msra.mxu0 0.0
          %421 = vmatprep.subr.mxu0 0.0
          %422 = vmatpush1.msra.mxu0 0.0
          %423 = vmatprep.subr.mxu0 0.0
          %424 = vmatpush1.msra.mxu0 0.0
          %425 = vmatprep.subr.mxu0 0.0
          %426 = vmatpush1.msra.mxu0 0.0
          %427 = vmatprep.subr.mxu0 0.0
          %428 = vmatpush1.msra.mxu0 %v336
          %429 = vmatprep.subr.mxu0 0.0
          %430 = vmatpush1.msra.mxu0 %v335
          %431 = vmatprep.subr.mxu0 0.0
          %432 = vmatpush1.msra.mxu0 %v334
          %433 = vmatprep.subr.mxu0 0.0
          %434 = vmatpush1.msra.mxu0 %v333
          %435 = vmatprep.subr.mxu0 0.0
          %436 = vmatpush2.msra.mxu0 0.0
          %437 = vmatprep.subr.mxu0 0.0
          %438 = vmatpush2.msra.mxu0 0.0
          %439 = vmatprep.subr.mxu0 0.0
          %440 = vmatpush2.msra.mxu0 0.0
          %441 = vmatprep.subr.mxu0 0.0
          %442 = vmatpush2.msra.mxu0 0.0
          %443 = vmatprep.subr.mxu0 0.0
          %444 = vmatpush2.msra.mxu0 0.0
          %445 = vmatprep.subr.mxu0 0.0
          %446 = vmatpush2.msra.mxu0 0.0
          %447 = vmatprep.subr.mxu0 0.0
          %448 = vmatpush2.msra.mxu0 0.0
          %449 = vmatprep.subr.mxu0 0.0
          %450 = vmatpush2.msra.mxu0 0.0
          %451 = vmatprep.subr.mxu0 0.0
          %452 = vmatpush2.msra.mxu0 0.0
          %453 = vmatprep.subr.mxu0 0.0
          %454 = vmatpush2.msra.mxu0 0.0
          %455 = vmatprep.subr.mxu0 0.0
          %456 = vmatpush2.msra.mxu0 0.0
          %457 = vmatprep.subr.mxu0 0.0
          %458 = vmatpush2.msra.mxu0 0.0
          %459 = vmatprep.subr.mxu0 0.0
          %460 = vmatpush2.msra.mxu0 0.0
          %461 = vmatprep.subr.mxu0 0.0
          %462 = vmatpush2.msra.mxu0 0.0
          %463 = vmatprep.subr.mxu0 0.0
          %464 = vmatpush2.msra.mxu0 0.0
          %465 = vmatprep.subr.mxu0 0.0
          %466 = vmatpush2.msra.mxu0 0.0
          %467 = vmatprep.mubr.f32.mxu0 0.0
          %468 = vmatmul.mubr.f32.gmra.mxu0 %v401
          %v469 = vpop.f32.mrf.mxu0
          %v470 = vadd.f32 %v342, %v469
          %v471 = vpop.f32.mrf.mxu0
          %472 = vdwg.mxu0
          %v473 = vmax.f32 %v470, 0.0
          %v474 = vld [vmem:[%s3] sm:$0x3]
          %v475 = vld [vmem:[%s4] sm:$0x1]
          %v477 = vlaneseq
          %v478 = vshrl.u32 %v477, 7
          %v479 = vsub.s32 0, %v478
          %v480 = vrot.slane %v475, %v479
          %vm482 = vcmask 15360
          %v484 = vsel %vm482, %v473, 0
          %vm486 = vcmask 1041408
          %v488 = vsel %vm486, %v474, 0
          %490 = vmatprep.subr.mxu0 0.0
          %491 = vmatpush1.msra.mxu0 0.0
          %492 = vmatprep.subr.mxu0 0.0
          %493 = vmatpush1.msra.mxu0 0.0
          %494 = vmatprep.subr.mxu0 0.0
          %495 = vmatpush1.msra.mxu0 0.0
          %496 = vmatprep.subr.mxu0 0.0
          %497 = vmatpush1.msra.mxu0 0.0
          %498 = vmatprep.subr.mxu0 0.0
          %499 = vmatpush1.msra.mxu0 0.0
          %500 = vmatprep.subr.mxu0 0.0
          %501 = vmatpush1.msra.mxu0 0.0
          %502 = vmatprep.subr.mxu0 0.0
          %503 = vmatpush1.msra.mxu0 0.0
          %504 = vmatprep.subr.mxu0 0.0
          %505 = vmatpush1.msra.mxu0 0.0
          %506 = vmatprep.subr.mxu0 0.0
          %507 = vmatpush1.msra.mxu0 0.0
          %508 = vmatprep.subr.mxu0 0.0
          %509 = vmatpush1.msra.mxu0 0.0
          %510 = vmatprep.subr.mxu0 0.0
          %511 = vmatpush1.msra.mxu0 0.0
          %512 = vmatprep.subr.mxu0 0.0
          %513 = vmatpush1.msra.mxu0 0.0
          %514 = vmatprep.subr.mxu0 0.0
          %515 = vmatpush1.msra.mxu0 0.0
          %516 = vmatprep.subr.mxu0 0.0
          %517 = vmatpush1.msra.mxu0 0.0
          %518 = vmatprep.subr.mxu0 0.0
          %519 = vmatpush1.msra.mxu0 0.0
          %520 = vmatprep.subr.mxu0 0.0
          %521 = vmatpush1.msra.mxu0 %v488
          %522 = vmatprep.subr.mxu0 0.0
          %523 = vmatpush2.msra.mxu0 0.0
          %524 = vmatprep.subr.mxu0 0.0
          %525 = vmatpush2.msra.mxu0 0.0
          %526 = vmatprep.subr.mxu0 0.0
          %527 = vmatpush2.msra.mxu0 0.0
          %528 = vmatprep.subr.mxu0 0.0
          %529 = vmatpush2.msra.mxu0 0.0
          %530 = vmatprep.subr.mxu0 0.0
          %531 = vmatpush2.msra.mxu0 0.0
          %532 = vmatprep.subr.mxu0 0.0
          %533 = vmatpush2.msra.mxu0 0.0
          %534 = vmatprep.subr.mxu0 0.0
          %535 = vmatpush2.msra.mxu0 0.0
          %536 = vmatprep.subr.mxu0 0.0
          %537 = vmatpush2.msra.mxu0 0.0
          %538 = vmatprep.subr.mxu0 0.0
          %539 = vmatpush2.msra.mxu0 0.0
          %540 = vmatprep.subr.mxu0 0.0
          %541 = vmatpush2.msra.mxu0 0.0
          %542 = vmatprep.subr.mxu0 0.0
          %543 = vmatpush2.msra.mxu0 0.0
          %544 = vmatprep.subr.mxu0 0.0
          %545 = vmatpush2.msra.mxu0 0.0
          %546 = vmatprep.subr.mxu0 0.0
          %547 = vmatpush2.msra.mxu0 0.0
          %548 = vmatprep.subr.mxu0 0.0
          %549 = vmatpush2.msra.mxu0 0.0
          %550 = vmatprep.subr.mxu0 0.0
          %551 = vmatpush2.msra.mxu0 0.0
          %552 = vmatprep.subr.mxu0 0.0
          %553 = vmatpush2.msra.mxu0 0.0
          %554 = vmatprep.mubr.f32.mxu0 0.0
          %555 = vmatmul.mubr.f32.gmra.mxu0 %v484
          %v556 = vpop.f32.mrf.mxu0
          %v557 = vadd.f32 %v480, %v556
          %v558 = vpop.f32.mrf.mxu0
          %559 = vdwg.mxu0
          %v560 = vxor.u32 %v557, 2147483648
          %v561 = vmul.f32 %v560, 1.442695
          %v562 = vpow.pop %v561
          %v563 = vadd.f32 %v562, 1.0
          %v564 = vrcp.pop %v563
          %v565 = vmul.f32 1.0, %v564
          %vm566 = vcmask 254976
          %567 = vst.msk [vmem:[#allocation6] sm:$0x3] %vm566, %v565
        $region52: #{tpu_custom_call.1} parent=39 // pred_fallthru
          _
        // Predicated region
        $region53: #{tpu_custom_call.1} parent=39 // pred_check
          %p568 = pneg %p162
        $region54: #{tpu_custom_call.1} parent=39 // pred_check_branch
          %570 = sbr.rel (%p568) target = $region56
        $region55: #{tpu_custom_call.1} parent=39 // pred_region
          %s572 = ssub.s32 32, 32
          %573 = vsyncadd [#allocation5], %s572
          %s574 = smul.addr %s24, 32
          %s575 = scalar_lea.hbm %s5, %s574
          %s577 = sshll.u32 [#allocation6], 4
          %s578 = int_to_ptr.vmem [resolvable:$true] %s577
          %580 = dma.vmem_to_hbm [thread:$0]  %s578, 32, %s575, [#allocation5]
        $region56: #{tpu_custom_call.1} parent=39 // pred_fallthru
          _
        // Predicated region
        $region57: #{tpu_custom_call.1} parent=39 // pred_check
          %p581 = pneg %p162
        $region58: #{tpu_custom_call.1} parent=39 // pred_check_branch
          %583 = sbr.rel (%p581) target = $region60
        $region59: #{tpu_custom_call.1} parent=39 // pred_region
          %584 = dma.done [#allocation5], 32
        $region60: #{tpu_custom_call.1} parent=39 // pred_fallthru
          _
      $region40: #{tpu_custom_call.1} parent=5 // pred_fallthru
        _
      %p585 = scmp.le.s32.totalorder 2, %s15
      // Predicated region
      $region61: #{tpu_custom_call.1} parent=5 // pred_check
        %p586 = pneg %p585
      $region62: #{tpu_custom_call.1} parent=5 // pred_check_branch
        %588 = sbr.rel (%p586) target = $region64
      $region63: #{tpu_custom_call.1} parent=5 // pred_region
        %s589 = ssub.s32 %s15, 2
      $region64: #{tpu_custom_call.1} parent=5 // pred_fallthru
        _
    $region6: #{tpu_custom_call.1} parent=1 // loop_footer
      %s19 = sadd.s32 1, %s15
    $region7: #{tpu_custom_call.1} parent=1 // loop_footer_branch
      %14 = sbr.rel target = $region3
    $region8: #{tpu_custom_call.1} parent=1 // loop_exit
      _
    %590 = vsyncpa [#allocation4], 1
    %s591 = scalar_lea.sflag [#allocation4], 1
    %592 = vsyncpa %s591, 1
    %593 = vsyncpa [#allocation5], 1
    %s594 = scalar_lea.sflag [#allocation5], 1
    %595 = vsyncpa %s594, 1

</llo_original>
